<compile_context>
chip_gen: v6e
topology: v6e:2x2x1
jax: 0.10.0
libtpu: 0.0.40
codegen_flags: <defaults>
</compile_context>

<pallas_src>
import jax
import jax.numpy as jnp
from jax.experimental import pallas as pl
from jax.experimental.pallas import tpu as pltpu

HID = 32      # hid_dim
OUT = 16      # output_dim
SRC = 8       # encoder sequence length (max_length)


def attn_decoder_kernel(tok_ref,                      # VMEM (T, 1)       token values
                        hid0_ref,                     # VMEM (1, H)       initial decoder state
                        enc_ref,                      # VMEM (S, H)       encoder states (keys/values)
                        w_hid_ref, b_hid_ref,         # (H, 4H+O),(1,4H+O) [Wq|Whh_r|Whh_z|Whh_n|Wout]
                        wk_ref, we_ref,               # (H, H), (1, H)
                        w_ctx_ref,                    # (H, 3H)           context-side GRU gate weights
                        w_x_ref, b_i_ref,             # (1, 3H), (1, 3H)  token-side gate weights / bias
                        preds_ref,                    # out VMEM (T, O)
                        hids_ref,                     # out VMEM (T, H)
                        gx_ref):                      # scratch VMEM (T, 3H)
    T = preds_ref.shape[0]
    H = enc_ref.shape[1]
    G = 4 * H                                         # column where the fused Wout block starts

    # ---- loop-invariant precompute (weights stay vreg/VMEM-resident for all T steps) ----
    enc_bf = enc_ref[...].astype(jnp.bfloat16)
    # key projection and context-side gate projection do NOT depend on the decoder state.
    pk = jnp.dot(enc_bf, wk_ref[...].astype(jnp.bfloat16),
                 preferred_element_type=jnp.float32)                          # (S, H)
    enc_ctx = jnp.dot(enc_bf, w_ctx_ref[...].astype(jnp.bfloat16),
                      preferred_element_type=jnp.float32)                     # (S, 3H)
    we_row = we_ref[...]                                                      # (1, H)
    w_hid = w_hid_ref[...].astype(jnp.bfloat16)                               # bf16 once
    b_hid = b_hid_ref[...]                                                    # (1, 4H+O) f32
    # token-side gate term for every step, vectorised once: (T,1)*(1,3H)+(1,3H) -> (T,3H)
    gx_ref[...] = tok_ref[...] * w_x_ref[...] + b_i_ref[...]

    def step(t, hidden):                                                      # hidden: (1, H) f32
        # --- the single per-step MXU pass: [q | gh_r | gh_z | gh_n | pred_{t-1}] ---
        hid_all = jnp.dot(hidden.astype(jnp.bfloat16), w_hid,
                          preferred_element_type=jnp.float32) + b_hid         # (1, 4H+O)
        q = hid_all[:, 0:H]                                                   # (1, H)
        gh = hid_all[:, H:G]                                                  # (1, 3H)
        # hidden @ Wout + bout == prediction of the PREVIOUS step (carry == h_{t-1}).
        # At t == 0 this is h_init @ Wout (not a prediction); row 0 is overwritten at
        # t == 1 (or by the epilogue when T == 1), so the deferred write is safe.
        preds_ref[pl.ds(jnp.maximum(t - 1, 0), 1), :] = hid_all[:, G:]

        # --- Bahdanau additive attention: e_j = w_e . tanh(Wq q + Wk h_j) ---
        e = jnp.tanh(q + pk)                                                  # (S, H)
        scores = jnp.sum(e * we_row, axis=-1, keepdims=True)                  # (S, 1) lane reduce
        m = jnp.max(scores, axis=0, keepdims=True)                            # (1, 1)
        ex = jnp.exp(scores - m)
        inv = pl.reciprocal(jnp.sum(ex, axis=0, keepdims=True), approx=True)  # EUP reciprocal
        alphas = ex * inv                                                     # (S, 1) softmax

        # --- GRU gates; context matmul hoisted: (alphas^T enc) Wc == alphas^T (enc Wc) ---
        gi = gx_ref[pl.ds(t, 1), :] + jnp.sum(alphas * enc_ctx, axis=0, keepdims=True)  # (1, 3H)
        r = jax.nn.sigmoid(gi[:, 0:H] + gh[:, 0:H])
        z = jax.nn.sigmoid(gi[:, H:2 * H] + gh[:, H:2 * H])
        n = jnp.tanh(gi[:, 2 * H:] + r * gh[:, 2 * H:])
        h_new = (1.0 - z) * n + z * hidden                                    # (1, H)

        hids_ref[pl.ds(t, 1), :] = h_new
        return h_new

    h_last = jax.lax.fori_loop(0, T, step, hid0_ref[...], unroll=True)

    # epilogue: prediction of the final step (the deferred-write pattern leaves it here)
    last_all = jnp.dot(h_last.astype(jnp.bfloat16), w_hid,
                       preferred_element_type=jnp.float32) + b_hid
    preds_ref[pl.ds(T - 1, 1), :] = last_all[:, G:]


# ------------------------------ wrappers ------------------------------

def pack_params(p):
    """Column-fuse all hidden-side weights (query proj, the three GRU hidden gates, fc_out)
    so each decode step needs exactly ONE small MXU matmul.
    NOTE (v5e): on v5e keep `wout`/`bout` out of `w_hid`/`b_hid` and do the fc_out dot
    separately -- 4H = 128 exactly fills its 128-wide MXU tile; the 144-column fusion
    targets the 256-wide MXU of v6e/v7x."""
    H = p["wq"].shape[0]
    zeros = jnp.zeros((1, H), jnp.float32)
    return {
        "w_hid": jnp.concatenate(
            [p["wq"], p["whh"][0], p["whh"][1], p["whh"][2], p["wout"]], axis=1),   # (H, 4H+O)
        "b_hid": jnp.concatenate(
            [zeros, p["b_h"][0], p["b_h"][1], p["b_h"][2], p["bout"]], axis=1),     # (1, 4H+O)
        "wk":    p["wk"],
        "we":    p["we"].reshape(1, H),
        "w_ctx": jnp.concatenate([p["wih_c"][0], p["wih_c"][1], p["wih_c"][2]], axis=1),  # (H, 3H)
        "w_x":   jnp.concatenate([p["wih_x"][0], p["wih_x"][1], p["wih_x"][2]], axis=1),  # (1, 3H)
        "b_i":   jnp.concatenate([p["b_i"][0], p["b_i"][1], p["b_i"][2]], axis=1),        # (1, 3H)
    }


def attention_decoder_decode(tokens, hidden, encoder_hidden, fp):
    """Run T chained decoder steps (teacher-forced token inputs) in ONE pallas_call.
    tokens: (T,), hidden: (1,1,H), encoder_hidden: (1,S,H).
    Returns (predictions (T, O), hidden states (T, H))."""
    H = fp["wk"].shape[0]
    O = fp["w_hid"].shape[1] - 4 * H
    tok = jnp.asarray(tokens, jnp.float32).reshape(-1, 1)                     # (T, 1)
    T = tok.shape[0]
    hid2 = hidden.reshape(1, H).astype(jnp.float32)
    enc2 = encoder_hidden.reshape(-1, H).astype(jnp.float32)

    vmem = pl.BlockSpec(memory_space=pltpu.MemorySpace.VMEM)
    args = (tok, hid2, enc2,
            fp["w_hid"], fp["b_hid"], fp["wk"], fp["we"],
            fp["w_ctx"], fp["w_x"], fp["b_i"])

    preds, hiddens = pl.pallas_call(
        attn_decoder_kernel,
        out_shape=(jax.ShapeDtypeStruct((T, O), jnp.float32),
                   jax.ShapeDtypeStruct((T, H), jnp.float32)),
        in_specs=[vmem] * len(args),
        out_specs=(vmem, vmem),
        scratch_shapes=[pltpu.VMEM((T, 3 * H), jnp.float32)],
    )(*args)
    return preds, hiddens


def attention_decoder_forward(inp, hidden, encoder_hidden, fp):
    """Single decoder step matching the torch module's forward:
    returns (prediction (1,1,O), new_hidden (1,1,H))."""
    preds, hiddens = attention_decoder_decode(
        jnp.asarray(inp, jnp.float32).reshape(1), hidden, encoder_hidden, fp)
    return preds.reshape(1, 1, -1), hiddens.reshape(1, 1, -1)


# ------------------------------ params & reference ------------------------------

def init_params(key, hid_dim, output_dim):
    ks = jax.random.split(key, 10)
    s = 0.1
    return {
        # attention
        "wq":    s * jax.random.normal(ks[0], (hid_dim, hid_dim), jnp.float32),
        "wk":    s * jax.random.normal(ks[1], (hid_dim, hid_dim), jnp.float32),
        "we":    s * jax.random.normal(ks[2], (hid_dim, 1), jnp.float32),
        # GRU(input = 1 + hid_dim, hidden = hid_dim): gate order (r, z, n)
        "wih_x": s * jax.random.normal(ks[3], (3, 1, hid_dim), jnp.float32),        # scalar-input rows
        "wih_c": s * jax.random.normal(ks[4], (3, hid_dim, hid_dim), jnp.float32),  # context rows
        "whh":   s * jax.random.normal(ks[5], (3, hid_dim, hid_dim), jnp.float32),
        "b_i":   s * jax.random.normal(ks[6], (3, 1, hid_dim), jnp.float32),
        "b_h":   s * jax.random.normal(ks[7], (3, 1, hid_dim), jnp.float32),
        # fc_out
        "wout":  s * jax.random.normal(ks[8], (hid_dim, output_dim), jnp.float32),
        "bout":  s * jax.random.normal(ks[9], (1, output_dim), jnp.float32),
    }


def reference_step(x, h, enc, p):
    """Pure-JAX single-step reference with the torch module's semantics
    (unfused weight layout, independent of the kernel's fused packing)."""
    q = h @ p["wq"]                                            # (1, H)
    pk = enc @ p["wk"]                                         # (S, H)
    e = jnp.tanh(q + pk)
    scores = jnp.sum(e * p["we"].reshape(1, -1), axis=-1)      # (S,)  == (e @ we).squeeze
    alphas = jax.nn.softmax(scores)
    context = (alphas[:, None] * enc).sum(0, keepdims=True)    # (1, H)
    x = jnp.asarray(x, jnp.float32)

    def gi(k): return x * p["wih_x"][k] + context @ p["wih_c"][k] + p["b_i"][k]
    def gh(k): return h @ p["whh"][k] + p["b_h"][k]

    r = jax.nn.sigmoid(gi(0) + gh(0))
    z = jax.nn.sigmoid(gi(1) + gh(1))
    n = jnp.tanh(gi(2) + r * gh(2))
    h_new = (1.0 - z) * n + z * h
    pred = h_new @ p["wout"] + p["bout"]
    return pred, h_new


if __name__ == "__main__":
    key = jax.random.PRNGKey(0)
    k_p, k_h, k_e, k_x, k_t = jax.random.split(key, 5)

    params = init_params(k_p, HID, OUT)
    fused = pack_params(params)

    # Inputs matching the torch forward: scalar token value, GRU hidden (1,1,H),
    # encoder_hidden (1, src_len, H).
    inp = jax.random.normal(k_x, (), jnp.float32)
    hidden = jax.random.normal(k_h, (1, 1, HID), jnp.float32)
    encoder_hidden = jax.random.normal(k_e, (1, SRC, HID), jnp.float32)

    # --- single step: exact module semantics ---
    pred, h_new = attention_decoder_forward(inp, hidden, encoder_hidden, fused)
    jax.block_until_ready((pred, h_new))
    assert pred.shape == (1, 1, OUT) and h_new.shape == (1, 1, HID)

    pred_ref, h_ref = reference_step(inp, hidden.reshape(1, HID),
                                     encoder_hidden.reshape(SRC, HID), params)
    # Tolerances account for the deliberate bf16-fed MXU dots (f32 accumulate) and the
    # approximate-EUP softmax reciprocal in the kernel vs. the default-precision reference.
    assert jnp.allclose(pred.reshape(1, OUT), pred_ref, atol=2e-3, rtol=2e-3)
    assert jnp.allclose(h_new.reshape(1, HID), h_ref, atol=2e-3, rtol=2e-3)

    # --- T chained decode steps inside ONE pallas_call (launch overhead amortized) ---
    T = 6
    tokens = jax.random.normal(k_t, (T,), jnp.float32)
    preds, hiddens = attention_decoder_decode(tokens, hidden, encoder_hidden, fused)
    jax.block_until_ready((preds, hiddens))
    assert preds.shape == (T, OUT) and hiddens.shape == (T, HID)

    h = hidden.reshape(1, HID)
    enc2 = encoder_hidden.reshape(SRC, HID)
    for t in range(T):
        p_ref, h = reference_step(tokens[t], h, enc2, params)
        assert jnp.allclose(preds[t], p_ref.reshape(OUT), atol=5e-3, rtol=5e-3), t
        assert jnp.allclose(hiddens[t], h.reshape(HID), atol=5e-3, rtol=5e-3), t

    print("KERNEL_OK")
</pallas_src>

<mosaic_0001>
module attributes {stable_mosaic.version = 11 : i64} {
  func.func @attn_decoder_kernel(%arg0: memref<1x1xf32, #tpu.memory_space<vmem>>, %arg1: memref<1x32xf32, #tpu.memory_space<vmem>>, %arg2: memref<8x32xf32, #tpu.memory_space<vmem>>, %arg3: memref<32x144xf32, #tpu.memory_space<vmem>>, %arg4: memref<1x144xf32, #tpu.memory_space<vmem>>, %arg5: memref<32x32xf32, #tpu.memory_space<vmem>>, %arg6: memref<1x32xf32, #tpu.memory_space<vmem>>, %arg7: memref<32x96xf32, #tpu.memory_space<vmem>>, %arg8: memref<1x96xf32, #tpu.memory_space<vmem>>, %arg9: memref<1x96xf32, #tpu.memory_space<vmem>>, %arg10: memref<1x16xf32, #tpu.memory_space<vmem>>, %arg11: memref<1x32xf32, #tpu.memory_space<vmem>>, %arg12: memref<1x96xf32, #tpu.memory_space<vmem>>) attributes {dimension_semantics = [], scalar_prefetch = 0 : i64, scratch_operands = 1 : i64, tpu.core_type = #tpu.core_type<tc>} {
    %c0 = arith.constant 0 : index
    %c0_0 = arith.constant 0 : index
    %0 = vector.load %arg2[%c0, %c0_0] : memref<8x32xf32, #tpu.memory_space<vmem>>, vector<8x32xf32>
    %1 = arith.truncf %0 : vector<8x32xf32> to vector<8x32xbf16>
    %c0_1 = arith.constant 0 : index
    %c0_2 = arith.constant 0 : index
    %2 = vector.load %arg5[%c0_1, %c0_2] : memref<32x32xf32, #tpu.memory_space<vmem>>, vector<32x32xf32>
    %3 = arith.truncf %2 : vector<32x32xf32> to vector<32x32xbf16>
    %cst = arith.constant dense<0.000000e+00> : vector<8x32xf32>
    %4 = tpu.matmul %1, %3, %cst {dimension_numbers = #tpu.dot_dimension_numbers<[1], [0], [0], [1], [0, 0, 1, 1], [], []>} : vector<8x32xbf16>, vector<32x32xbf16>, vector<8x32xf32> -> vector<8x32xf32>
    %c0_3 = arith.constant 0 : index
    %c0_4 = arith.constant 0 : index
    %5 = vector.load %arg7[%c0_3, %c0_4] : memref<32x96xf32, #tpu.memory_space<vmem>>, vector<32x96xf32>
    %6 = arith.truncf %5 : vector<32x96xf32> to vector<32x96xbf16>
    %cst_5 = arith.constant dense<0.000000e+00> : vector<8x96xf32>
    %7 = tpu.matmul %1, %6, %cst_5 {dimension_numbers = #tpu.dot_dimension_numbers<[1], [0], [0], [1], [0, 0, 1, 1], [], []>} : vector<8x32xbf16>, vector<32x96xbf16>, vector<8x96xf32> -> vector<8x96xf32>
    %c0_6 = arith.constant 0 : index
    %c0_7 = arith.constant 0 : index
    %8 = vector.load %arg6[%c0_6, %c0_7] : memref<1x32xf32, #tpu.memory_space<vmem>>, vector<1x32xf32>
    %c0_8 = arith.constant 0 : index
    %c0_9 = arith.constant 0 : index
    %9 = vector.load %arg3[%c0_8, %c0_9] : memref<32x144xf32, #tpu.memory_space<vmem>>, vector<32x144xf32>
    %10 = arith.truncf %9 : vector<32x144xf32> to vector<32x144xbf16>
    %c0_10 = arith.constant 0 : index
    %c0_11 = arith.constant 0 : index
    %11 = vector.load %arg4[%c0_10, %c0_11] : memref<1x144xf32, #tpu.memory_space<vmem>>, vector<1x144xf32>
    %c0_12 = arith.constant 0 : index
    %c0_13 = arith.constant 0 : index
    %12 = vector.load %arg0[%c0_12, %c0_13] : memref<1x1xf32, #tpu.memory_space<vmem>>, vector<1x1xf32>
    %c0_14 = arith.constant 0 : index
    %c0_15 = arith.constant 0 : index
    %13 = vector.load %arg8[%c0_14, %c0_15] : memref<1x96xf32, #tpu.memory_space<vmem>>, vector<1x96xf32>
    %14 = vector.broadcast %12 : vector<1x1xf32> to vector<1x96xf32>
    %15 = arith.mulf %14, %13 : vector<1x96xf32>
    %c0_16 = arith.constant 0 : index
    %c0_17 = arith.constant 0 : index
    %16 = vector.load %arg9[%c0_16, %c0_17] : memref<1x96xf32, #tpu.memory_space<vmem>>, vector<1x96xf32>
    %17 = arith.addf %15, %16 : vector<1x96xf32>
    %c0_18 = arith.constant 0 : index
    %c0_19 = arith.constant 0 : index
    %18 = vector.load %arg12[%c0_18, %c0_19] : memref<1x96xf32, #tpu.memory_space<vmem>>, vector<1x96xf32>
    tpu.vector_store %arg12[%c0_18, %c0_19], %17 {strides = array<i32>} : memref<1x96xf32, #tpu.memory_space<vmem>>, vector<1x96xf32>,
    %c0_20 = arith.constant 0 : index
    %c0_21 = arith.constant 0 : index
    %19 = vector.load %arg1[%c0_20, %c0_21] : memref<1x32xf32, #tpu.memory_space<vmem>>, vector<1x32xf32>
    %c0_i32 = arith.constant 0 : i32
    %20 = arith.truncf %19 : vector<1x32xf32> to vector<1x32xbf16>
    %cst_22 = arith.constant dense<0.000000e+00> : vector<1x144xf32>
    %21 = tpu.matmul %20, %10, %cst_22 {dimension_numbers = #tpu.dot_dimension_numbers<[1], [0], [0], [1], [0, 0, 1, 1], [], []>} : vector<1x32xbf16>, vector<32x144xbf16>, vector<1x144xf32> -> vector<1x144xf32>
    %22 = arith.addf %21, %11 : vector<1x144xf32>
    %23 = vector.extract_strided_slice %22 {offsets = [0, 0], sizes = [1, 32], strides = [1, 1]} : vector<1x144xf32> to vector<1x32xf32>
    %24 = vector.extract_strided_slice %22 {offsets = [0, 32], sizes = [1, 96], strides = [1, 1]} : vector<1x144xf32> to vector<1x96xf32>
    %25 = vector.extract_strided_slice %22 {offsets = [0, 128], sizes = [1, 16], strides = [1, 1]} : vector<1x144xf32> to vector<1x16xf32>
    %c1_i32 = arith.constant 1 : i32
    %26 = arith.subi %c0_i32, %c1_i32 : i32
    %c0_i32_23 = arith.constant 0 : i32
    %27 = arith.maxsi %26, %c0_i32_23 : i32
    %28 = arith.index_cast %27 : i32 to index
    %c0_24 = arith.constant 0 : index
    %29 = vector.load %arg10[%28, %c0_24] : memref<1x16xf32, #tpu.memory_space<vmem>>, vector<1x16xf32>
    tpu.vector_store %arg10[%28, %c0_24], %25 {strides = array<i32>} : memref<1x16xf32, #tpu.memory_space<vmem>>, vector<1x16xf32>,
    %30 = vector.broadcast %23 : vector<1x32xf32> to vector<8x32xf32>
    %31 = arith.addf %30, %4 : vector<8x32xf32>
    %32 = math.tanh %31 : vector<8x32xf32>
    %33 = vector.broadcast %8 : vector<1x32xf32> to vector<8x32xf32>
    %34 = arith.mulf %32, %33 : vector<8x32xf32>
    %cst_25 = arith.constant dense<0.000000e+00> : vector<8xf32>
    %35 = vector.multi_reduction <add>, %34, %cst_25 [1] : vector<8x32xf32> to vector<8xf32>
    %36 = vector.shape_cast %35 : vector<8xf32> to vector<8x1xf32>
    %cst_26 = arith.constant dense<0xFF800000> : vector<1xf32>
    %37 = vector.multi_reduction <maximumf>, %36, %cst_26 [0] : vector<8x1xf32> to vector<1xf32>
    %38 = vector.shape_cast %37 : vector<1xf32> to vector<1x1xf32>
    %39 = vector.broadcast %38 : vector<1x1xf32> to vector<8x1xf32>
    %40 = arith.subf %36, %39 : vector<8x1xf32>
    %41 = math.exp %40 : vector<8x1xf32>
    %cst_27 = arith.constant dense<0.000000e+00> : vector<1xf32>
    %42 = vector.multi_reduction <add>, %41, %cst_27 [0] : vector<8x1xf32> to vector<1xf32>
    %43 = vector.shape_cast %42 : vector<1xf32> to vector<1x1xf32>
    %44 = tpu.reciprocal %43 {approx = true} : vector<1x1xf32> -> vector<1x1xf32>
    %45 = vector.broadcast %44 : vector<1x1xf32> to vector<8x1xf32>
    %46 = arith.mulf %41, %45 : vector<8x1xf32>
    %47 = arith.index_cast %c0_i32 : i32 to index
    %c0_28 = arith.constant 0 : index
    %48 = vector.load %arg12[%47, %c0_28] : memref<1x96xf32, #tpu.memory_space<vmem>>, vector<1x96xf32>
    %49 = vector.broadcast %46 : vector<8x1xf32> to vector<8x96xf32>
    %50 = arith.mulf %49, %7 : vector<8x96xf32>
    %cst_29 = arith.constant dense<0.000000e+00> : vector<96xf32>
    %51 = vector.multi_reduction <add>, %50, %cst_29 [0] : vector<8x96xf32> to vector<96xf32>
    %52 = vector.shape_cast %51 : vector<96xf32> to vector<1x96xf32>
    %53 = arith.addf %48, %52 : vector<1x96xf32>
    %54 = vector.extract_strided_slice %53 {offsets = [0, 0], sizes = [1, 32], strides = [1, 1]} : vector<1x96xf32> to vector<1x32xf32>
    %55 = vector.extract_strided_slice %24 {offsets = [0, 0], sizes = [1, 32], strides = [1, 1]} : vector<1x96xf32> to vector<1x32xf32>
    %56 = arith.addf %54, %55 : vector<1x32xf32>
    %57 = arith.negf %56 : vector<1x32xf32>
    %58 = math.exp %57 : vector<1x32xf32>
    %cst_30 = arith.constant 1.000000e+00 : f32
    %59 = vector.broadcast %cst_30 : f32 to vector<1x32xf32>
    %60 = arith.addf %59, %58 : vector<1x32xf32>
    %61 = arith.divf %59, %60 : vector<1x32xf32>
    %62 = vector.extract_strided_slice %53 {offsets = [0, 32], sizes = [1, 32], strides = [1, 1]} : vector<1x96xf32> to vector<1x32xf32>
    %63 = vector.extract_strided_slice %24 {offsets = [0, 32], sizes = [1, 32], strides = [1, 1]} : vector<1x96xf32> to vector<1x32xf32>
    %64 = arith.addf %62, %63 : vector<1x32xf32>
    %65 = arith.negf %64 : vector<1x32xf32>
    %66 = math.exp %65 : vector<1x32xf32>
    %cst_31 = arith.constant 1.000000e+00 : f32
    %67 = vector.broadcast %cst_31 : f32 to vector<1x32xf32>
    %68 = arith.addf %67, %66 : vector<1x32xf32>
    %69 = arith.divf %67, %68 : vector<1x32xf32>
    %70 = vector.extract_strided_slice %53 {offsets = [0, 64], sizes = [1, 32], strides = [1, 1]} : vector<1x96xf32> to vector<1x32xf32>
    %71 = vector.extract_strided_slice %24 {offsets = [0, 64], sizes = [1, 32], strides = [1, 1]} : vector<1x96xf32> to vector<1x32xf32>
    %72 = arith.mulf %61, %71 : vector<1x32xf32>
    %73 = arith.addf %70, %72 : vector<1x32xf32>
    %74 = math.tanh %73 : vector<1x32xf32>
    %cst_32 = arith.constant 1.000000e+00 : f32
    %75 = vector.broadcast %cst_32 : f32 to vector<1x32xf32>
    %76 = arith.subf %75, %69 : vector<1x32xf32>
    %77 = arith.mulf %76, %74 : vector<1x32xf32>
    %78 = arith.mulf %69, %19 : vector<1x32xf32>
    %79 = arith.addf %77, %78 : vector<1x32xf32>
    %80 = arith.index_cast %c0_i32 : i32 to index
    %c0_33 = arith.constant 0 : index
    %81 = vector.load %arg11[%80, %c0_33] : memref<1x32xf32, #tpu.memory_space<vmem>>, vector<1x32xf32>
    tpu.vector_store %arg11[%80, %c0_33], %79 {strides = array<i32>} : memref<1x32xf32, #tpu.memory_space<vmem>>, vector<1x32xf32>,
    %c1_i32_34 = arith.constant 1 : i32
    %82 = arith.truncf %79 : vector<1x32xf32> to vector<1x32xbf16>
    %cst_35 = arith.constant dense<0.000000e+00> : vector<1x144xf32>
    %83 = tpu.matmul %82, %10, %cst_35 {dimension_numbers = #tpu.dot_dimension_numbers<[1], [0], [0], [1], [0, 0, 1, 1], [], []>} : vector<1x32xbf16>, vector<32x144xbf16>, vector<1x144xf32> -> vector<1x144xf32>
    %84 = arith.addf %83, %11 : vector<1x144xf32>
    %85 = vector.extract_strided_slice %84 {offsets = [0, 128], sizes = [1, 16], strides = [1, 1]} : vector<1x144xf32> to vector<1x16xf32>
    %c0_36 = arith.constant 0 : index
    %c0_37 = arith.constant 0 : index
    %86 = vector.load %arg10[%c0_36, %c0_37] : memref<1x16xf32, #tpu.memory_space<vmem>>, vector<1x16xf32>
    tpu.vector_store %arg10[%c0_36, %c0_37], %85 {strides = array<i32>} : memref<1x16xf32, #tpu.memory_space<vmem>>, vector<1x16xf32>,
    return
  }
}

</mosaic_0001>

<llo_original>
// kernel: tpu_custom_call.1
$region0: #{tpu_custom_call.1}
  #allocation0 [shape = 'u32[]', space=smem, size = 0x4, offset = 0x4, fixed_abs, tag = 'smem constant byte address 0x4 - core index']
  #allocation1 [shape = 'u32[144,128]{1,0:T(1,128)}', space=vmem, size = 0x12000, scoped, tag = 'internal scratch']
  #allocation2 [shape = 'f32[1,96]{1,0:T(1,128)}', space=vmem, size = 0x200, scoped, tag = 'scratch operand']
  #allocation3 [shape = 'f32[1,1]{1,0:T(1,128)S(1)}', space=vmem, size = 0x200, scoped, tag = 'scoped memory for tpu_custom_call.1']
  %s0 = inlined_call_operand.<no memory space> [shape: f32[1,1], index: 0, kind: input, shape index: {}]
  %s1 = inlined_call_operand.vmem [shape: f32[1,32], index: 1, kind: input, shape index: {}]
  %s2 = inlined_call_operand.hbm [shape: f32[8,32], index: 2, kind: input, shape index: {}]
  %s3 = inlined_call_operand.hbm [shape: f32[32,144], index: 3, kind: input, shape index: {}]
  %s4 = inlined_call_operand.vmem [shape: f32[1,144], index: 4, kind: input, shape index: {}]
  %s5 = inlined_call_operand.hbm [shape: f32[32,32], index: 5, kind: input, shape index: {}]
  %s6 = inlined_call_operand.vmem [shape: f32[1,32], index: 6, kind: input, shape index: {}]
  %s7 = inlined_call_operand.hbm [shape: f32[32,96], index: 7, kind: input, shape index: {}]
  %s8 = inlined_call_operand.vmem [shape: f32[1,96], index: 8, kind: input, shape index: {}]
  %s9 = inlined_call_operand.vmem [shape: f32[1,96], index: 9, kind: input, shape index: {}]
  %s10 = inlined_call_operand.hbm [shape: f32[1,16], index: 10, kind: output, shape index: {0}]
  %s11 = inlined_call_operand.hbm [shape: f32[1,32], index: 11, kind: output, shape index: {1}]
  %12 = xla_tuple %s10, %s11
  %s13 = sld [smem:[#allocation0]]
  $region74: #{tpu_custom_call.1} parent=0
    _
  %s15 = ssub.s32 1, %s13
  %s16 = scalar_select 0, %s15, %s13
  %v17 = vstv %s0
  %18 = vst [vmem:[#allocation3] sm:$0x1] %v17
  $region1: #{tpu_custom_call.1} parent=0
    #allocation4 [shape = 'u8[4096]{0}', space=vmem, size = 0x1000, scoped, tag = 'input window, operand 2, single buffered']
    #allocation5 [shape = 's32[1]{0}', space=sflag, size = 0x4, scoped, tag = 'scoped memory for tpu_custom_call.1']
    #allocation6 [shape = 's32[1]{0}', space=sflag, size = 0x4, scoped, tag = 'scoped memory for tpu_custom_call.1']
    #allocation7 [shape = 'u8[32768]{0}', space=vmem, size = 0x8000, scoped, tag = 'input window, operand 3, single buffered']
    #allocation8 [shape = 's32[1]{0}', space=sflag, size = 0x4, scoped, tag = 'scoped memory for tpu_custom_call.1']
    #allocation9 [shape = 'u8[16384]{0}', space=vmem, size = 0x4000, scoped, tag = 'input window, operand 5, single buffered']
    #allocation10 [shape = 'u8[16384]{0}', space=vmem, size = 0x4000, scoped, tag = 'input window, operand 7, single buffered']
    #allocation11 [shape = 's32[1]{0}', space=sflag, size = 0x4, scoped, tag = 'scoped memory for tpu_custom_call.1']
    #allocation12 [shape = 'u8[512]{0}', space=vmem, size = 0x400, scoped, tag = 'output window, operand 0, single buffered']
    #allocation13 [shape = 'u8[512]{0}', space=vmem, size = 0x400, scoped, tag = 'output window, operand 1, single buffered']
    #allocation14 [shape = 's32[1]{0}', space=sflag, size = 0x4, scoped, tag = 'scoped memory for tpu_custom_call.1']
    %19 = vsyncpa [#allocation5], 0
    %20 = vsyncpa [#allocation8], 0
    %21 = vsyncpa [#allocation11], 0
    %22 = vsyncpa [#allocation6], 0
    %23 = vsyncpa [#allocation14], 0
    // Predicated region
    $region2: #{tpu_custom_call.1} parent=1 // pred_check
      _
    $region3: #{tpu_custom_call.1} parent=1 // pred_check_branch
      %25 = sbr.rel (0) target = $region5
    $region4: #{tpu_custom_call.1} parent=1 // pred_region
      _
    $region5: #{tpu_custom_call.1} parent=1 // pred_fallthru
      _
    // Predicated region
    $region6: #{tpu_custom_call.1} parent=1 // pred_check
      _
    $region7: #{tpu_custom_call.1} parent=1 // pred_check_branch
      %27 = sbr.rel (0) target = $region9
    $region8: #{tpu_custom_call.1} parent=1 // pred_region
      _
    $region9: #{tpu_custom_call.1} parent=1 // pred_fallthru
      _
    // Predicated region
    $region10: #{tpu_custom_call.1} parent=1 // pred_check
      _
    $region11: #{tpu_custom_call.1} parent=1 // pred_check_branch
      %29 = sbr.rel (0) target = $region13
    $region12: #{tpu_custom_call.1} parent=1 // pred_region
      %s31 = ssub.s32 128, 128
      %32 = vsyncadd [#allocation5], %s31
      %s34 = sshll.u32 [#allocation4], 4
      %s35 = int_to_ptr.vmem [resolvable:$true] %s34
      %37 = dma.hbm_to_vmem [thread:$0]  %s2, 128, %s35, [#allocation5]
    $region13: #{tpu_custom_call.1} parent=1 // pred_fallthru
      _
    // Predicated region
    $region14: #{tpu_custom_call.1} parent=1 // pred_check
      _
    $region15: #{tpu_custom_call.1} parent=1 // pred_check_branch
      %39 = sbr.rel (0) target = $region17
    $region16: #{tpu_custom_call.1} parent=1 // pred_region
      %s41 = ssub.s32 1024, 1024
      %42 = vsyncadd [#allocation8], %s41
      %s43 = sshll.u32 [#allocation7], 4
      %s44 = int_to_ptr.vmem [resolvable:$true] %s43
      %49 = dma.hbm_to_vmem [thread:$0]  %s3, 1024, %s44, [#allocation8], 256, 256, 16
    $region17: #{tpu_custom_call.1} parent=1 // pred_fallthru
      _
    // Predicated region
    $region18: #{tpu_custom_call.1} parent=1 // pred_check
      _
    $region19: #{tpu_custom_call.1} parent=1 // pred_check_branch
      %51 = sbr.rel (0) target = $region21
    $region20: #{tpu_custom_call.1} parent=1 // pred_region
      _
    $region21: #{tpu_custom_call.1} parent=1 // pred_fallthru
      _
    // Predicated region
    $region22: #{tpu_custom_call.1} parent=1 // pred_check
      _
    $region23: #{tpu_custom_call.1} parent=1 // pred_check_branch
      %53 = sbr.rel (0) target = $region25
    $region24: #{tpu_custom_call.1} parent=1 // pred_region
      %s55 = ssub.s32 512, 512
      %56 = vsyncadd [#allocation8], %s55
      %s57 = sshll.u32 [#allocation9], 4
      %s58 = int_to_ptr.vmem [resolvable:$true] %s57
      %63 = dma.hbm_to_vmem [thread:$0]  %s5, 512, %s58, [#allocation8], 128, 128, 8
    $region25: #{tpu_custom_call.1} parent=1 // pred_fallthru
      _
    // Predicated region
    $region26: #{tpu_custom_call.1} parent=1 // pred_check
      _
    $region27: #{tpu_custom_call.1} parent=1 // pred_check_branch
      %65 = sbr.rel (0) target = $region29
    $region28: #{tpu_custom_call.1} parent=1 // pred_region
      _
    $region29: #{tpu_custom_call.1} parent=1 // pred_fallthru
      _
    // Predicated region
    $region30: #{tpu_custom_call.1} parent=1 // pred_check
      _
    $region31: #{tpu_custom_call.1} parent=1 // pred_check_branch
      %67 = sbr.rel (0) target = $region33
    $region32: #{tpu_custom_call.1} parent=1 // pred_region
      %s69 = ssub.s32 512, 512
      %70 = vsyncadd [#allocation11], %s69
      %s71 = sshll.u32 [#allocation10], 4
      %s72 = int_to_ptr.vmem [resolvable:$true] %s71
      %77 = dma.hbm_to_vmem [thread:$0]  %s7, 512, %s72, [#allocation11], 128, 128, 8
    $region33: #{tpu_custom_call.1} parent=1 // pred_fallthru
      _
    // Predicated region
    $region34: #{tpu_custom_call.1} parent=1 // pred_check
      _
    $region35: #{tpu_custom_call.1} parent=1 // pred_check_branch
      %79 = sbr.rel (0) target = $region37
    $region36: #{tpu_custom_call.1} parent=1 // pred_region
      _
    $region37: #{tpu_custom_call.1} parent=1 // pred_fallthru
      _
    // Predicated region
    $region38: #{tpu_custom_call.1} parent=1 // pred_check
      _
    $region39: #{tpu_custom_call.1} parent=1 // pred_check_branch
      %81 = sbr.rel (0) target = $region41
    $region40: #{tpu_custom_call.1} parent=1 // pred_region
      _
    $region41: #{tpu_custom_call.1} parent=1 // pred_fallthru
      _
    // Predicated region
    $region42: #{tpu_custom_call.1} parent=1 // pred_check
      _
    $region43: #{tpu_custom_call.1} parent=1 // pred_check_branch
      %83 = sbr.rel (0) target = $region45
    $region44: #{tpu_custom_call.1} parent=1 // pred_region
      %84 = dma.done [#allocation5], 128
    $region45: #{tpu_custom_call.1} parent=1 // pred_fallthru
      _
    // Predicated region
    $region46: #{tpu_custom_call.1} parent=1 // pred_check
      _
    $region47: #{tpu_custom_call.1} parent=1 // pred_check_branch
      %86 = sbr.rel (0) target = $region49
    $region48: #{tpu_custom_call.1} parent=1 // pred_region
      %87 = dma.done [#allocation8], 1024
    $region49: #{tpu_custom_call.1} parent=1 // pred_fallthru
      _
    // Predicated region
    $region50: #{tpu_custom_call.1} parent=1 // pred_check
      _
    $region51: #{tpu_custom_call.1} parent=1 // pred_check_branch
      %89 = sbr.rel (0) target = $region53
    $region52: #{tpu_custom_call.1} parent=1 // pred_region
      %90 = dma.done [#allocation8], 512
    $region53: #{tpu_custom_call.1} parent=1 // pred_fallthru
      _
    // Predicated region
    $region54: #{tpu_custom_call.1} parent=1 // pred_check
      _
    $region55: #{tpu_custom_call.1} parent=1 // pred_check_branch
      %92 = sbr.rel (0) target = $region57
    $region56: #{tpu_custom_call.1} parent=1 // pred_region
      %93 = dma.done [#allocation11], 512
    $region57: #{tpu_custom_call.1} parent=1 // pred_fallthru
      _
    %v95 = vld [vmem:[#allocation4] sm:$0xff]
    %v96 = vpack.c.bf16 %v95, %v95
    %v97 = vld [vmem:[#allocation9] sm:$0xff]
    %v98 = vld [vmem:[#allocation9 + $0x8] sm:$0xff]
    %v99 = vld [vmem:[#allocation9 + $0x10] sm:$0xff]
    %v100 = vld [vmem:[#allocation9 + $0x18] sm:$0xff]
    %v101 = vpack.c.bf16 %v98, %v97
    %v102 = vpack.c.bf16 %v100, %v99
    %vm103 = vcmask 261120
    %v105 = vsel %vm103, %v96, 0
    %107 = vmatprep.subr.bf16.mxu0 0
    %108 = vmatpush1.bf16.msra.mxu0 0
    %109 = vmatprep.subr.bf16.mxu0 0
    %110 = vmatpush1.bf16.msra.mxu0 0
    %111 = vmatprep.subr.bf16.mxu0 0
    %112 = vmatpush1.bf16.msra.mxu0 0
    %113 = vmatprep.subr.bf16.mxu0 0
    %114 = vmatpush1.bf16.msra.mxu0 0
    %115 = vmatprep.subr.bf16.mxu0 0
    %116 = vmatpush1.bf16.msra.mxu0 0
    %117 = vmatprep.subr.bf16.mxu0 0
    %118 = vmatpush1.bf16.msra.mxu0 0
    %119 = vmatprep.subr.bf16.mxu0 0
    %120 = vmatpush1.bf16.msra.mxu0 %v102
    %121 = vmatprep.subr.bf16.mxu0 0
    %122 = vmatpush1.bf16.msra.mxu0 %v101
    %123 = vmatprep.subr.bf16.mxu0 0
    %124 = vmatpush2.bf16.msra.mxu0 0
    %125 = vmatprep.subr.bf16.mxu0 0
    %126 = vmatpush2.bf16.msra.mxu0 0
    %127 = vmatprep.subr.bf16.mxu0 0
    %128 = vmatpush2.bf16.msra.mxu0 0
    %129 = vmatprep.subr.bf16.mxu0 0
    %130 = vmatpush2.bf16.msra.mxu0 0
    %131 = vmatprep.subr.bf16.mxu0 0
    %132 = vmatpush2.bf16.msra.mxu0 0
    %133 = vmatprep.subr.bf16.mxu0 0
    %134 = vmatpush2.bf16.msra.mxu0 0
    %135 = vmatprep.subr.bf16.mxu0 0
    %136 = vmatpush2.bf16.msra.mxu0 0
    %137 = vmatprep.subr.bf16.mxu0 0
    %138 = vmatpush2.bf16.msra.mxu0 0
    %139 = vmatprep.mubr.bf16.mxu0 0
    %140 = vmatmul.mubr.bf16.gmra.mxu0 %v105
    %v141 = vpop.f32.mrf.mxu0
    %v142 = vadd.f32 0.0, %v141
    %v143 = vpop.f32.mrf.mxu0
    %v144 = vpop.f32.mrf.mxu0
    %v145 = vpop.f32.mrf.mxu0
    %146 = vdwg.mxu0
    %v147 = vld [vmem:[#allocation10] sm:$0xff]
    %v148 = vld [vmem:[#allocation10 + $0x8] sm:$0xff]
    %v149 = vld [vmem:[#allocation10 + $0x10] sm:$0xff]
    %v150 = vld [vmem:[#allocation10 + $0x18] sm:$0xff]
    %v151 = vpack.c.bf16 %v148, %v147
    %v152 = vpack.c.bf16 %v150, %v149
    %153 = vmatprep.subr.bf16.mxu0 0
    %154 = vmatpush1.bf16.msra.mxu0 0
    %155 = vmatprep.subr.bf16.mxu0 0
    %156 = vmatpush1.bf16.msra.mxu0 0
    %157 = vmatprep.subr.bf16.mxu0 0
    %158 = vmatpush1.bf16.msra.mxu0 0
    %159 = vmatprep.subr.bf16.mxu0 0
    %160 = vmatpush1.bf16.msra.mxu0 0
    %161 = vmatprep.subr.bf16.mxu0 0
    %162 = vmatpush1.bf16.msra.mxu0 0
    %163 = vmatprep.subr.bf16.mxu0 0
    %164 = vmatpush1.bf16.msra.mxu0 0
    %165 = vmatprep.subr.bf16.mxu0 0
    %166 = vmatpush1.bf16.msra.mxu0 %v152
    %167 = vmatprep.subr.bf16.mxu0 0
    %168 = vmatpush1.bf16.msra.mxu0 %v151
    %169 = vmatprep.subr.bf16.mxu0 0
    %170 = vmatpush2.bf16.msra.mxu0 0
    %171 = vmatprep.subr.bf16.mxu0 0
    %172 = vmatpush2.bf16.msra.mxu0 0
    %173 = vmatprep.subr.bf16.mxu0 0
    %174 = vmatpush2.bf16.msra.mxu0 0
    %175 = vmatprep.subr.bf16.mxu0 0
    %176 = vmatpush2.bf16.msra.mxu0 0
    %177 = vmatprep.subr.bf16.mxu0 0
    %178 = vmatpush2.bf16.msra.mxu0 0
    %179 = vmatprep.subr.bf16.mxu0 0
    %180 = vmatpush2.bf16.msra.mxu0 0
    %181 = vmatprep.subr.bf16.mxu0 0
    %182 = vmatpush2.bf16.msra.mxu0 0
    %183 = vmatprep.subr.bf16.mxu0 0
    %184 = vmatpush2.bf16.msra.mxu0 0
    %185 = vmatprep.mubr.bf16.mxu0 0
    %186 = vmatmul.mubr.bf16.gmra.mxu0 %v105
    %v187 = vpop.f32.mrf.mxu0
    %v188 = vadd.f32 0.0, %v187
    %v189 = vpop.f32.mrf.mxu0
    %v190 = vpop.f32.mrf.mxu0
    %v191 = vpop.f32.mrf.mxu0
    %192 = vdwg.mxu0
    %v193 = vld [vmem:[%s6] sm:$0x1]
    %v194 = vld [vmem:[#allocation7] sm:$0xff]
    %v195 = vld [vmem:[#allocation7 + $0x8] sm:$0xff]
    %v196 = vld [vmem:[#allocation7 + $0x10] sm:$0xff]
    %v197 = vld [vmem:[#allocation7 + $0x18] sm:$0xff]
    %v198 = vld [vmem:[#allocation7 + $0x20] sm:$0xff]
    %v199 = vld [vmem:[#allocation7 + $0x28] sm:$0xff]
    %v200 = vld [vmem:[#allocation7 + $0x30] sm:$0xff]
    %v201 = vld [vmem:[#allocation7 + $0x38] sm:$0xff]
    %v202 = vpack.c.bf16 %v196, %v194
    %v203 = vpack.c.bf16 %v197, %v195
    %v204 = vpack.c.bf16 %v200, %v198
    %v205 = vpack.c.bf16 %v201, %v199
    %v206 = vld [vmem:[%s4] sm:$0x3]
    %v207 = vld [vmem:[#allocation3] sm:$0x1]
    %v208 = vld [vmem:[%s8] sm:$0x1]
    %210 = vset.pattern.permute.xlu0 0
    %211 = vperm.xlu0 %210, %v207
    %v212 = vpop.permute.xlu0 %211
    %v214 = vlaneseq
    %v215 = vshrl.u32 %v214, 7
    %v216 = vsub.s32 0, %v215
    %v217 = vrot.slane %v212, %v216
    %v218 = vmul.f32 %v217, %v208
    %v219 = vld [vmem:[%s9] sm:$0x1]
    %v220 = vadd.f32 %v218, %v219
    %vm221 = vcmask 778240
    %222 = vst.msk [vmem:[#allocation2] sm:$0x1] %vm221, %v220
    %v223 = vld [vmem:[%s1] sm:$0x1]
    %v224 = vpack.c.bf16 %v223, %v223
    %v226 = vlaneseq
    %v227 = vshrl.u32 %v226, 7
    %v228 = vsub.s32 0, %v227
    %v229 = vrot.slane %v206, %v228
    %v230 = vlaneseq
    %v231 = vshrl.u32 %v230, 7
    %v232 = vsub.s32 1, %v231
    %v233 = vrot.slane %v206, %v232
    %v237 = vsel %vm103, %v224, 0
    %239 = vmatprep.subr.bf16.mxu0 0
    %240 = vmatpush1.bf16.msra.mxu0 0
    %241 = vmatprep.subr.bf16.mxu0 0
    %242 = vmatpush1.bf16.msra.mxu0 0
    %243 = vmatprep.subr.bf16.mxu0 0
    %244 = vmatpush1.bf16.msra.mxu0 0
    %245 = vmatprep.subr.bf16.mxu0 0
    %246 = vmatpush1.bf16.msra.mxu0 0
    %247 = vmatprep.subr.bf16.mxu0 0
    %248 = vmatpush1.bf16.msra.mxu0 0
    %249 = vmatprep.subr.bf16.mxu0 0
    %250 = vmatpush1.bf16.msra.mxu0 0
    %251 = vmatprep.subr.bf16.mxu0 %v205
    %252 = vmatpush1.bf16.msra.mxu0 %v204
    %253 = vmatprep.subr.bf16.mxu0 %v203
    %254 = vmatpush1.bf16.msra.mxu0 %v202
    %255 = vmatprep.subr.bf16.mxu0 0
    %256 = vmatpush2.bf16.msra.mxu0 0
    %257 = vmatprep.subr.bf16.mxu0 0
    %258 = vmatpush2.bf16.msra.mxu0 0
    %259 = vmatprep.subr.bf16.mxu0 0
    %260 = vmatpush2.bf16.msra.mxu0 0
    %261 = vmatprep.subr.bf16.mxu0 0
    %262 = vmatpush2.bf16.msra.mxu0 0
    %263 = vmatprep.subr.bf16.mxu0 0
    %264 = vmatpush2.bf16.msra.mxu0 0
    %265 = vmatprep.subr.bf16.mxu0 0
    %266 = vmatpush2.bf16.msra.mxu0 0
    %267 = vmatprep.subr.bf16.mxu0 0
    %268 = vmatpush2.bf16.msra.mxu0 0
    %269 = vmatprep.subr.bf16.mxu0 0
    %270 = vmatpush2.bf16.msra.mxu0 0
    %271 = vmatprep.mubr.bf16.mxu0 0
    %272 = vmatmul.mubr.bf16.gmra.mxu0 %v237
    %v273 = vpop.f32.mrf.mxu0
    %v274 = vadd.f32 %v229, %v273
    %v275 = vpop.f32.mrf.mxu0
    %v276 = vadd.f32 %v233, %v275
    %v277 = vpop.f32.mrf.mxu0
    %v278 = vpop.f32.mrf.mxu0
    %279 = vdwg.mxu0
    %vm280 = vcmask 122880
    %281 = vst.msk [vmem:[#allocation12] sm:$0x1] %vm280, %v276
    %v282 = vlaneseq
    %v283 = vshrl.u32 %v282, 7
    %v284 = vsub.s32 0, %v283
    %v285 = vrot.slane %v274, %v284
    %v286 = vadd.f32 %v285, %v142
    %v287 = vtanh.pop %v286
    %v289 = vlaneseq
    %v290 = vshrl.u32 %v289, 7
    %v291 = vsub.s32 0, %v290
    %v292 = vrot.slane %v193, %v291
    %v294 = vmul.f32 %v287, %v292
    %v295 = vsel %vm103, %v294, 0.0
    %296 = vadd.xlane.f32.xlu0 %v295
    %v297 = vpop.xlane.xlu0 %296
    %v298 = vrot.slane %v297, 4
    %v299 = vmax.f32 %v297, %v298
    %v300 = vrot.slane %v299, 2
    %v301 = vmax.f32 %v299, %v300
    %v302 = vrot.slane %v301, 1
    %v303 = vmax.f32 %v301, %v302
    %v304 = vsub.f32 %v297, %v303
    %v305 = vmul.f32 %v304, 1.442695
    %v306 = vpow.pop %v305
    %v307 = vrot.slane %v306, 4
    %v308 = vadd.f32 %v306, %v307
    %v309 = vrot.slane %v308, 2
    %v310 = vadd.f32 %v308, %v309
    %v311 = vrot.slane %v310, 1
    %v312 = vadd.f32 %v310, %v311
    %v313 = vrcp.pop %v312
    %v314 = vmul.f32 %v306, %v313
    %v315 = vld [vmem:[#allocation2] sm:$0x1]
    %v316 = vmul.f32 %v314, %v188
    %vm317 = vcmask 785408
    %v318 = vsel %vm317, %v316, 0.0
    %v319 = vrot.slane %v318, 4
    %v320 = vadd.f32 %v318, %v319
    %v321 = vrot.slane %v320, 2
    %v322 = vadd.f32 %v320, %v321
    %v323 = vrot.slane %v322, 1
    %v324 = vadd.f32 %v322, %v323
    %v325 = vadd.f32 %v315, %v324
    %v328 = vunpack.c.l.s4 1966171168
    %v329 = vunpack.c.0.s8 %v328
    %v330 = vlaneseq
    %v331 = vshrl.u32 %v330, 7
    %v332 = vsub.s32 %v329, %v331
    %v333 = vrot.slane %v274, %v332
    %v335 = vunpack.c.l.s4 1966171168
    %v336 = vunpack.c.0.s8 %v335
    %v337 = vlaneseq
    %v338 = vshrl.u32 %v337, 7
    %v339 = vsub.s32 %v336, %v338
    %v340 = vrot.slane %v333, %v339
    %341 = vrot.lane.b32.xlu0 %v340, 96
    %v342 = vpop.permute.xlu0 %341
    %v344 = vadd.f32 %v325, %v342
    %v345 = vxor.u32 %v344, 2147483648
    %v346 = vmul.f32 %v345, 1.442695
    %v347 = vpow.pop %v346
    %v348 = vadd.f32 %v347, 1.0
    %v349 = vrcp.pop %v348
    %v350 = vmul.f32 1.0, %v349
    %351 = vrot.lane.b32.xlu0 %v340, 32
    %v352 = vpop.permute.xlu0 %351
    %v354 = vmul.f32 %v350, %v352
    %356 = vrot.lane.b32.xlu0 %v354, 64
    %v357 = vpop.permute.xlu0 %356
    %v359 = vadd.f32 %v325, %v357
    %v360 = vtanh.pop %v359
    %v361 = vsub.f32 1.0, %v350
    %363 = vrot.lane.b32.xlu0 %v360, 96
    %v364 = vpop.permute.xlu0 %363
    %v366 = vmul.f32 %v361, %v364
    %368 = vrot.lane.b32.xlu0 %v223, 32
    %v369 = vpop.permute.xlu0 %368
    %v371 = vmul.f32 %v350, %v369
    %v372 = vadd.f32 %v366, %v371
    %v374 = vlaneseq
    %v375 = vshrl.u32 %v374, 7
    %v376 = vsub.s32 0, %v375
    %v377 = vrot.slane %v372, %v376
    %378 = vrot.lane.b32.xlu0 %v377, 96
    %v379 = vpop.permute.xlu0 %378
    %vm381 = vcmask 253952
    %382 = vst.msk [vmem:[#allocation13] sm:$0x1] %vm381, %v379
    %v383 = vpack.c.bf16 %v372, %v372
    %385 = vrot.lane.b32.xlu0 %v383, 96
    %v386 = vpop.permute.xlu0 %385
    %v388 = vsel %vm103, %v386, 0
    %390 = vmatprep.subr.bf16.mxu0 0
    %391 = vmatpush1.bf16.msra.mxu0 0
    %392 = vmatprep.subr.bf16.mxu0 0
    %393 = vmatpush1.bf16.msra.mxu0 0
    %394 = vmatprep.subr.bf16.mxu0 0
    %395 = vmatpush1.bf16.msra.mxu0 0
    %396 = vmatprep.subr.bf16.mxu0 0
    %397 = vmatpush1.bf16.msra.mxu0 0
    %398 = vmatprep.subr.bf16.mxu0 0
    %399 = vmatpush1.bf16.msra.mxu0 0
    %400 = vmatprep.subr.bf16.mxu0 0
    %401 = vmatpush1.bf16.msra.mxu0 0
    %402 = vmatprep.subr.bf16.mxu0 %v205
    %403 = vmatpush1.bf16.msra.mxu0 %v204
    %404 = vmatprep.subr.bf16.mxu0 %v203
    %405 = vmatpush1.bf16.msra.mxu0 %v202
    %406 = vmatprep.subr.bf16.mxu0 0
    %407 = vmatpush2.bf16.msra.mxu0 0
    %408 = vmatprep.subr.bf16.mxu0 0
    %409 = vmatpush2.bf16.msra.mxu0 0
    %410 = vmatprep.subr.bf16.mxu0 0
    %411 = vmatpush2.bf16.msra.mxu0 0
    %412 = vmatprep.subr.bf16.mxu0 0
    %413 = vmatpush2.bf16.msra.mxu0 0
    %414 = vmatprep.subr.bf16.mxu0 0
    %415 = vmatpush2.bf16.msra.mxu0 0
    %416 = vmatprep.subr.bf16.mxu0 0
    %417 = vmatpush2.bf16.msra.mxu0 0
    %418 = vmatprep.subr.bf16.mxu0 0
    %419 = vmatpush2.bf16.msra.mxu0 0
    %420 = vmatprep.subr.bf16.mxu0 0
    %421 = vmatpush2.bf16.msra.mxu0 0
    %422 = vmatprep.mubr.bf16.mxu0 0
    %423 = vmatmul.mubr.bf16.gmra.mxu0 %v388
    %v424 = vpop.f32.mrf.mxu0
    %v425 = vpop.f32.mrf.mxu0
    %v426 = vadd.f32 %v233, %v425
    %v427 = vpop.f32.mrf.mxu0
    %v428 = vpop.f32.mrf.mxu0
    %429 = vdwg.mxu0
    %430 = vst.msk [vmem:[#allocation12] sm:$0x1] %vm280, %v426
    // Predicated region
    $region58: #{tpu_custom_call.1} parent=1 // pred_check
      _
    $region59: #{tpu_custom_call.1} parent=1 // pred_check_branch
      %432 = sbr.rel (0) target = $region61
    $region60: #{tpu_custom_call.1} parent=1 // pred_region
      %s434 = ssub.s32 16, 16
      %435 = vsyncadd [#allocation6], %s434
      %s437 = sshll.u32 [#allocation12], 4
      %s438 = int_to_ptr.vmem [resolvable:$true] %s437
      %440 = dma.vmem_to_hbm [thread:$0]  %s438, 16, %s10, [#allocation6]
    $region61: #{tpu_custom_call.1} parent=1 // pred_fallthru
      _
    // Predicated region
    $region62: #{tpu_custom_call.1} parent=1 // pred_check
      _
    $region63: #{tpu_custom_call.1} parent=1 // pred_check_branch
      %442 = sbr.rel (0) target = $region65
    $region64: #{tpu_custom_call.1} parent=1 // pred_region
      %s444 = ssub.s32 16, 16
      %445 = vsyncadd [#allocation14], %s444
      %s447 = sshll.u32 [#allocation13], 4
      %s448 = int_to_ptr.vmem [resolvable:$true] %s447
      %450 = dma.vmem_to_hbm [thread:$0]  %s448, 16, %s11, [#allocation14]
    $region65: #{tpu_custom_call.1} parent=1 // pred_fallthru
      _
    // Predicated region
    $region66: #{tpu_custom_call.1} parent=1 // pred_check
      _
    $region67: #{tpu_custom_call.1} parent=1 // pred_check_branch
      %452 = sbr.rel (0) target = $region69
    $region68: #{tpu_custom_call.1} parent=1 // pred_region
      %453 = dma.done [#allocation6], 16
    $region69: #{tpu_custom_call.1} parent=1 // pred_fallthru
      _
    // Predicated region
    $region70: #{tpu_custom_call.1} parent=1 // pred_check
      _
    $region71: #{tpu_custom_call.1} parent=1 // pred_check_branch
      %455 = sbr.rel (0) target = $region73
    $region72: #{tpu_custom_call.1} parent=1 // pred_region
      %456 = dma.done [#allocation14], 16
    $region73: #{tpu_custom_call.1} parent=1 // pred_fallthru
      _
    %457 = vsyncpa [#allocation5], 1
    %458 = vsyncpa [#allocation8], 1
    %459 = vsyncpa [#allocation11], 1
    %460 = vsyncpa [#allocation6], 1
    %461 = vsyncpa [#allocation14], 1

</llo_original>
